<compile_context>
chip_gen: v5e
topology: v5e:2x2
jax: 0.10.0
libtpu: 0.0.40
codegen_flags: <defaults>
</compile_context>

<pallas_src>
import jax
import jax.numpy as jnp
from jax.experimental import pallas as pl
from jax.experimental.pallas import tpu as pltpu

IN_FEATURES = 4
OUT_FEATURES = 1
_LANE = 128


def linear_lane_kernel(xt_ref, w_ref, b_ref, o_ref):
    # xt_ref: [IN, TB] f32 in VMEM  (feature-major; batch on the lane axis)
    # w_ref : [IN]     f32 in SMEM  (scalar weights)
    # b_ref : [1]      f32 in SMEM  (scalar bias)
    # o_ref : [1, TB]  f32 in VMEM  (lane-dense output row)
    x = xt_ref[...]                                   # [IN, TB]
    y = (x[0:1, :] * w_ref[0]
         + x[1:2, :] * w_ref[1]
         + x[2:3, :] * w_ref[2]
         + x[3:4, :] * w_ref[3]
         + b_ref[0])                                  # 4 VPU FMAs + bias add
    o_ref[...] = y


def fake_neural_net_forward(x, weight, bias, *, lane_tile=2048):
    """Forward pass of FakeNeuralNet.

    x:      [B, IN]  f32
    weight: [OUT, IN] f32 (PyTorch nn.Linear layout, OUT == 1)
    bias:   [OUT]     f32
    returns [B, OUT] f32
    """
    B = x.shape[0]

    # Pad the batch to a multiple of 128 lanes, then tile it.
    b_pad = max(_LANE, ((B + _LANE - 1) // _LANE) * _LANE)
    tb = min(lane_tile, b_pad)
    b_pad = ((b_pad + tb - 1) // tb) * tb
    n_tiles = b_pad // tb

    x_t = x.T                                          # [IN, B]  feature-major
    if b_pad != B:
        x_t = jnp.pad(x_t, ((0, 0), (0, b_pad - B)))   # zero-pad lanes

    w_flat = weight.reshape(IN_FEATURES).astype(jnp.float32)   # [IN]
    b_flat = bias.reshape(OUT_FEATURES).astype(jnp.float32)    # [1]

    y_t = pl.pallas_call(
        linear_lane_kernel,
        out_shape=jax.ShapeDtypeStruct((1, b_pad), jnp.float32),
        grid_spec=pl.GridSpec(
            grid=(n_tiles,),
            in_specs=[
                pl.BlockSpec((IN_FEATURES, tb), lambda i: (0, i)),
                pl.BlockSpec(memory_space=pltpu.MemorySpace.SMEM),
                pl.BlockSpec(memory_space=pltpu.MemorySpace.SMEM),
            ],
            out_specs=pl.BlockSpec((1, tb), lambda i: (0, i)),
        ),
        compiler_params=pltpu.CompilerParams(
            dimension_semantics=("parallel",),
        ),
    )(x_t, w_flat, b_flat)                             # [1, b_pad]

    return y_t[0, :B].reshape(B, OUT_FEATURES)


if __name__ == "__main__":
    key = jax.random.PRNGKey(0)
    k_x, k_w, k_b, k_x2 = jax.random.split(key, 4)

    # Deterministic parameter init, mimicking torch.nn.Linear default:
    # uniform(-1/sqrt(in_features), 1/sqrt(in_features))
    bound = 1.0 / (IN_FEATURES ** 0.5)
    weight = jax.random.uniform(
        k_w, (OUT_FEATURES, IN_FEATURES), jnp.float32, -bound, bound)
    bias = jax.random.uniform(k_b, (OUT_FEATURES,), jnp.float32, -bound, bound)

    # Small batch (the module's typical test usage).
    B = 8
    x = jax.random.normal(k_x, (B, IN_FEATURES), jnp.float32)
    y = fake_neural_net_forward(x, weight, bias)
    jax.block_until_ready(y)
    y_ref = x @ weight.T + bias
    assert y.shape == (B, OUT_FEATURES)
    assert jnp.allclose(y, y_ref, atol=1e-5, rtol=1e-5)

    # A non-multiple-of-128 batch with a small lane tile to exercise the
    # padded, multi-tile "parallel" grid path.
    B2 = 300
    x2 = jax.random.normal(k_x2, (B2, IN_FEATURES), jnp.float32)
    y2 = fake_neural_net_forward(x2, weight, bias, lane_tile=128)
    jax.block_until_ready(y2)
    y2_ref = x2 @ weight.T + bias
    assert y2.shape == (B2, OUT_FEATURES)
    assert jnp.allclose(y2, y2_ref, atol=1e-5, rtol=1e-5)

    print("KERNEL_OK")
</pallas_src>

<mosaic_0001>
module attributes {stable_mosaic.version = 11 : i64} {
  func.func @linear_lane_kernel(%arg0: i32, %arg1: memref<4x128xf32, #tpu.memory_space<vmem>>, %arg2: memref<4xf32, #tpu.memory_space<smem>>, %arg3: memref<1xf32, #tpu.memory_space<smem>>, %arg4: memref<1x128xf32, #tpu.memory_space<vmem>>) attributes {dimension_semantics = [#tpu.dimension_semantics<parallel>], iteration_bounds = array<i64: 1>, scalar_prefetch = 0 : i64, scratch_operands = 0 : i64, tpu.core_type = #tpu.core_type<tc>, window_params = [{transform_indices = @transform_0, window_bounds = array<i64: 4, 128>}, {transform_indices = @transform_1, window_bounds = array<i64: 4>}, {transform_indices = @transform_2, window_bounds = array<i64: 1>}, {transform_indices = @transform_3, window_bounds = array<i64: 1, 128>}]} {
    %c0 = arith.constant 0 : index
    %c0_0 = arith.constant 0 : index
    %0 = vector.load %arg1[%c0, %c0_0] : memref<4x128xf32, #tpu.memory_space<vmem>>, vector<4x128xf32>
    %1 = vector.extract_strided_slice %0 {offsets = [0, 0], sizes = [1, 128], strides = [1, 1]} : vector<4x128xf32> to vector<1x128xf32>
    %c0_1 = arith.constant 0 : index
    %2 = memref.load %arg2[%c0_1] : memref<4xf32, #tpu.memory_space<smem>>
    %3 = vector.broadcast %2 : f32 to vector<1x128xf32>
    %4 = arith.mulf %1, %3 : vector<1x128xf32>
    %5 = vector.extract_strided_slice %0 {offsets = [1, 0], sizes = [1, 128], strides = [1, 1]} : vector<4x128xf32> to vector<1x128xf32>
    %c1 = arith.constant 1 : index
    %6 = memref.load %arg2[%c1] : memref<4xf32, #tpu.memory_space<smem>>
    %7 = vector.broadcast %6 : f32 to vector<1x128xf32>
    %8 = arith.mulf %5, %7 : vector<1x128xf32>
    %9 = arith.addf %4, %8 : vector<1x128xf32>
    %10 = vector.extract_strided_slice %0 {offsets = [2, 0], sizes = [1, 128], strides = [1, 1]} : vector<4x128xf32> to vector<1x128xf32>
    %c2 = arith.constant 2 : index
    %11 = memref.load %arg2[%c2] : memref<4xf32, #tpu.memory_space<smem>>
    %12 = vector.broadcast %11 : f32 to vector<1x128xf32>
    %13 = arith.mulf %10, %12 : vector<1x128xf32>
    %14 = arith.addf %9, %13 : vector<1x128xf32>
    %15 = vector.extract_strided_slice %0 {offsets = [3, 0], sizes = [1, 128], strides = [1, 1]} : vector<4x128xf32> to vector<1x128xf32>
    %c3 = arith.constant 3 : index
    %16 = memref.load %arg2[%c3] : memref<4xf32, #tpu.memory_space<smem>>
    %17 = vector.broadcast %16 : f32 to vector<1x128xf32>
    %18 = arith.mulf %15, %17 : vector<1x128xf32>
    %19 = arith.addf %14, %18 : vector<1x128xf32>
    %c0_2 = arith.constant 0 : index
    %20 = memref.load %arg3[%c0_2] : memref<1xf32, #tpu.memory_space<smem>>
    %21 = vector.broadcast %20 : f32 to vector<1x128xf32>
    %22 = arith.addf %19, %21 : vector<1x128xf32>
    %c0_3 = arith.constant 0 : index
    %c0_4 = arith.constant 0 : index
    %23 = vector.load %arg4[%c0_3, %c0_4] : memref<1x128xf32, #tpu.memory_space<vmem>>, vector<1x128xf32>
    tpu.vector_store %arg4[%c0_3, %c0_4], %22 {strides = array<i32>} : memref<1x128xf32, #tpu.memory_space<vmem>>, vector<1x128xf32>,
    return
  }
  func.func @transform_0(%arg0: i32) -> (i32, i32) {
    %c0_i32 = arith.constant 0 : i32
    %c0_i32_0 = arith.constant 0 : i32
    return %c0_i32, %arg0 : i32, i32
  }
  func.func @transform_1(%arg0: i32) -> i32 {
    %c0_i32 = arith.constant 0 : i32
    %c0_i32_0 = arith.constant 0 : i32
    return %c0_i32 : i32
  }
  func.func @transform_2(%arg0: i32) -> i32 {
    %c0_i32 = arith.constant 0 : i32
    %c0_i32_0 = arith.constant 0 : i32
    return %c0_i32 : i32
  }
  func.func @transform_3(%arg0: i32) -> (i32, i32) {
    %c0_i32 = arith.constant 0 : i32
    %c0_i32_0 = arith.constant 0 : i32
    return %c0_i32, %arg0 : i32, i32
  }
}

</mosaic_0001>

<llo_original>
// kernel: tpu_custom_call.1
$region0: #{tpu_custom_call.1}
  #allocation0 [shape = 'u32[]', space=smem, size = 0x4, offset = 0x4, fixed_abs, tag = 'smem constant byte address 0x4 - core index']
  #allocation1 [shape = 'u32[72,128]{1,0:T(1,128)}', space=vmem, size = 0x9000, scoped, tag = 'internal scratch']
  #allocation2 [shape = 'f32[1]{0:T(128)S(6)}', space=smem, size = 0x200, scoped, tag = 'scoped memory for tpu_custom_call.1']
  %s0 = inlined_call_operand.hbm [shape: f32[4,128], index: 0, kind: input, shape index: {}]
  %s1 = inlined_call_operand.vmem [shape: f32[4], index: 1, kind: input, shape index: {}]
  %s2 = inlined_call_operand.<no memory space> [shape: f32[1], index: 2, kind: input, shape index: {}]
  %s3 = inlined_call_operand.hbm [shape: f32[1,128], index: 3, kind: output, shape index: {}]
  %s4 = sld [smem:[#allocation0]]
  $region30: #{tpu_custom_call.1} parent=0
    _
  %s6 = ssub.s32 1, %s4
  %s7 = scalar_select 0, %s6, %s4
  %8 = sst [smem:[#allocation2]] %s2
  $region1: #{tpu_custom_call.1} parent=0
    #allocation3 [shape = 'u8[2048]{0}', space=vmem, size = 0x800, scoped, tag = 'input window, operand 0, single buffered']
    #allocation4 [shape = 's32[1]{0}', space=sflag, size = 0x4, scoped, tag = 'scoped memory for tpu_custom_call.1']
    #allocation5 [shape = 's32[1]{0}', space=sflag, size = 0x4, scoped, tag = 'scoped memory for tpu_custom_call.1']
    #allocation6 [shape = 's32[1]{0}', space=sflag, size = 0x4, scoped, tag = 'scoped memory for tpu_custom_call.1']
    #allocation7 [shape = 'u8[512]{0}', space=smem, size = 0x200, scoped, tag = 'input window, operand 1, single buffered']
    #allocation8 [shape = 'u8[512]{0}', space=vmem, size = 0x400, scoped, tag = 'output window, operand 0, single buffered']
    %9 = vsyncpa [#allocation4], 0
    %10 = vsyncpa [#allocation6], 0
    %11 = vsyncpa [#allocation5], 0
    // Predicated region
    $region2: #{tpu_custom_call.1} parent=1 // pred_check
      _
    $region3: #{tpu_custom_call.1} parent=1 // pred_check_branch
      %13 = sbr.rel (0) target = $region5
    $region4: #{tpu_custom_call.1} parent=1 // pred_region
      %15 = vsyncadd [#allocation4], 0
      %s17 = sshll.u32 %s0, 4
      %s18 = int_to_ptr.hbm [resolvable:$true] %s17
      %s19 = sshll.u32 [#allocation3], 4
      %s20 = int_to_ptr.vmem [resolvable:$true] %s19
      %22 = dma.hbm_to_vmem [thread:$0]  %s18, 64, %s20, [#allocation4]
    $region5: #{tpu_custom_call.1} parent=1 // pred_fallthru
      _
    // Predicated region
    $region6: #{tpu_custom_call.1} parent=1 // pred_check
      _
    $region7: #{tpu_custom_call.1} parent=1 // pred_check_branch
      %24 = sbr.rel (0) target = $region9
    $region8: #{tpu_custom_call.1} parent=1 // pred_region
      %26 = vsyncadd [#allocation6], 0
      %s28 = sshll.u32 %s1, 4
      %s29 = int_to_ptr.vmem [resolvable:$true] %s28
      %31 = dma.vmem_to_smem %s29, 16, [#allocation7], [#allocation6]
    $region9: #{tpu_custom_call.1} parent=1 // pred_fallthru
      _
    // Predicated region
    $region10: #{tpu_custom_call.1} parent=1 // pred_check
      _
    $region11: #{tpu_custom_call.1} parent=1 // pred_check_branch
      %33 = sbr.rel (0) target = $region13
    $region12: #{tpu_custom_call.1} parent=1 // pred_region
      _
    $region13: #{tpu_custom_call.1} parent=1 // pred_fallthru
      _
    // Predicated region
    $region14: #{tpu_custom_call.1} parent=1 // pred_check
      _
    $region15: #{tpu_custom_call.1} parent=1 // pred_check_branch
      %35 = sbr.rel (0) target = $region17
    $region16: #{tpu_custom_call.1} parent=1 // pred_region
      %37 = dma.done [#allocation4], 64
    $region17: #{tpu_custom_call.1} parent=1 // pred_fallthru
      _
    // Predicated region
    $region18: #{tpu_custom_call.1} parent=1 // pred_check
      _
    $region19: #{tpu_custom_call.1} parent=1 // pred_check_branch
      %39 = sbr.rel (0) target = $region21
    $region20: #{tpu_custom_call.1} parent=1 // pred_region
      %41 = dma.done [#allocation6], 16
    $region21: #{tpu_custom_call.1} parent=1 // pred_fallthru
      _
    %42 = sfence
    %v43 = vld [vmem:[#allocation3] sm:$0xf]
    %s44 = sld [smem:[#allocation7]]
    %v45 = vstv %s44
    %v46 = vmul.f32 %v43, %v45
    %s47 = sld [smem:[#allocation7 + $0x1]]
    %v48 = vstv %s47
    %v49 = vmul.f32 %v43, %v48
    %v51 = vrot.slane %v49, 1
    %v53 = vadd.f32 %v46, %v51
    %s54 = sld [smem:[#allocation7 + $0x2]]
    %v55 = vstv %s54
    %v56 = vmul.f32 %v43, %v55
    %v58 = vrot.slane %v56, 2
    %v60 = vadd.f32 %v53, %v58
    %s61 = sld [smem:[#allocation7 + $0x3]]
    %v62 = vstv %s61
    %v63 = vmul.f32 %v43, %v62
    %v65 = vrot.slane %v63, 3
    %v67 = vadd.f32 %v60, %v65
    %s68 = sld [smem:[#allocation2]]
    %v69 = vstv %s68
    %v70 = vadd.f32 %v67, %v69
    %71 = vst [vmem:[#allocation8] sm:$0x1] %v70
    // Predicated region
    $region22: #{tpu_custom_call.1} parent=1 // pred_check
      _
    $region23: #{tpu_custom_call.1} parent=1 // pred_check_branch
      %73 = sbr.rel (0) target = $region25
    $region24: #{tpu_custom_call.1} parent=1 // pred_region
      %75 = vsyncadd [#allocation5], 0
      %s77 = sshll.u32 [#allocation8], 4
      %s78 = int_to_ptr.vmem [resolvable:$true] %s77
      %s79 = sshll.u32 %s3, 4
      %s80 = int_to_ptr.hbm [resolvable:$true] %s79
      %82 = dma.vmem_to_hbm [thread:$0]  %s78, 16, %s80, [#allocation5]
    $region25: #{tpu_custom_call.1} parent=1 // pred_fallthru
      _
    // Predicated region
    $region26: #{tpu_custom_call.1} parent=1 // pred_check
      _
    $region27: #{tpu_custom_call.1} parent=1 // pred_check_branch
      %84 = sbr.rel (0) target = $region29
    $region28: #{tpu_custom_call.1} parent=1 // pred_region
      %86 = dma.done [#allocation5], 16
    $region29: #{tpu_custom_call.1} parent=1 // pred_fallthru
      _
    %87 = vsyncpa [#allocation4], 1
    %88 = vsyncpa [#allocation5], 1
    %89 = vsyncpa [#allocation6], 1

</llo_original>
